<compile_context>
chip_gen: v6e
topology: v6e:2x2x1
jax: 0.10.0
libtpu: 0.0.40
codegen_flags: <defaults>
</compile_context>

<pallas_src>
import functools

import jax
import jax.numpy as jnp
from jax.experimental import pallas as pl
from jax.experimental.pallas import tpu as pltpu


_LANES = 128
_SUBLANES = 8
_DEFAULT_TILE_TARGET_BYTES = 4 * 1024 * 1024  # ~4 MiB streaming tile (use 8 MiB on v7x)


def _round_up(x, m):
    return (x + m - 1) // m * m


def _vmem_capacity_bytes():
    """Physical VMEM per TensorCore; conservative fallback if the query fails."""
    try:
        return int(pltpu.get_tpu_info().vmem_capacity_bytes)
    except Exception:
        return 64 * 1024 * 1024  # v7x is the smallest (64 MiB); v5e/v6e have 128 MiB.


def _pick_batch_tile(num_rows, in_row_bytes, out_row_bytes, tile_target_bytes):
    """Byte-sized batch tile, clamped so double-buffered tiles fit the VMEM budget.

    Row byte counts are the lane-padded VMEM footprints, not the logical sizes.
    """
    cap = _vmem_capacity_bytes()
    budget = cap // 2                                   # leave compiler headroom
    per_row = in_row_bytes + out_row_bytes
    max_tile_bytes = max(_SUBLANES * per_row, budget // 4)  # 2 bufs << budget
    tile_bytes = min(tile_target_bytes, max_tile_bytes)
    tb = max(_SUBLANES, (tile_bytes // per_row) // _SUBLANES * _SUBLANES)
    tb = min(tb, _round_up(num_rows, _SUBLANES))
    # Scoped-VMEM limit: double-buffered x/out tiles + resident weight/selector slack.
    vmem_needed = 2 * tb * per_row + 256 * 1024
    vmem_limit = int(min(cap, max(32 * 1024 * 1024, 2 * vmem_needed)))
    return tb, vmem_limit


def _maybe_sigmoid(z, apply_sigmoid):
    if apply_sigmoid:
        # Exact sigmoid: exp hits the EUP slot; non-approx reciprocal keeps parity
        # with torch.sigmoid (EUP slot is otherwise idle, so approx buys nothing).
        z = pl.reciprocal(1.0 + jnp.exp(-z), approx=False)
    return z


def _loglinear_kernel(x_ref, w_ref, b_ref, o_ref, *, apply_sigmoid):
    # General path (D >= 128 or non-divisible packing).
    # x_ref: (TB, D) VMEM   w_ref: (1, D) VMEM (grid-invariant, stays resident)
    # b_ref: (1,)    SMEM   o_ref: (TB, 1) VMEM
    x = x_ref[...].astype(jnp.float32)      # no-op for f32, upcast for bf16 inputs
    w = w_ref[...].astype(jnp.float32)      # (1, D) broadcasts across sublanes
    z = jnp.sum(x * w, axis=-1, keepdims=True) + b_ref[0]   # VPU mul + XLU lane reduce
    o_ref[...] = _maybe_sigmoid(z, apply_sigmoid).astype(o_ref.dtype)


def _loglinear_packed_kernel(x_ref, w_ref, sel_ref, b_ref, o_ref, *, apply_sigmoid):
    # Lane-packed path for D < 128 (G = 128 // D rows packed per lane-row).
    # x_ref: (TB, 128) VMEM   w_ref: (1, 128) VMEM   sel_ref: (128, G) VMEM
    # b_ref: (1,) SMEM        o_ref: (TB, G) VMEM
    x = x_ref[...].astype(jnp.float32)
    w = w_ref[...].astype(jnp.float32)
    # Segmented lane reduction as one tiny MXU matmul against a block-diagonal
    # ones selector: (TB,128) @ (128,G) -> (TB,G) row dot-products.
    z = jnp.dot(x * w, sel_ref[...], preferred_element_type=jnp.float32) + b_ref[0]
    o_ref[...] = _maybe_sigmoid(z, apply_sigmoid).astype(o_ref.dtype)


@functools.partial(
    jax.jit, static_argnames=("apply_sigmoid", "tile_target_bytes", "core_parallel")
)
def _loglinear_call(x, weight, bias, *, apply_sigmoid,
                    tile_target_bytes=_DEFAULT_TILE_TARGET_BYTES,
                    core_parallel=False):
    """x: (B, D) f32/bf16 (caller may feed bf16 — do NOT pre-cast to f32);
    weight: (1, D) [PyTorch nn.Linear layout]; bias: (1,)."""
    B, D = x.shape
    weight = weight.reshape(1, D).astype(jnp.float32)
    bias = bias.reshape(1).astype(jnp.float32)

    itemsize = x.dtype.itemsize
    # Batch axis is embarrassingly parallel: CORE_PARALLEL shards it across the
    # two TensorCores on v7x; plain PARALLEL is the (near no-op) default elsewhere.
    semantics = (pltpu.CORE_PARALLEL,) if core_parallel else (pltpu.PARALLEL,)
    cost = pl.CostEstimate(
        flops=2 * B * D,
        transcendentals=B if apply_sigmoid else 0,
        bytes_accessed=B * D * itemsize + 4 * (B + D + 1),
    )

    use_packed = (D < _LANES) and (_LANES % D == 0) and ((B * D) % _LANES == 0) \
        and (B * D >= _LANES)

    if use_packed:
        G = _LANES // D                     # rows packed per 128-lane row
        Bp = (B * D) // _LANES              # packed row count
        xk = x.reshape(Bp, _LANES)          # contiguous reshape: free, no HBM copy
        wk = jnp.tile(weight, (1, G))       # (1, 128)
        # Block-diagonal segment-sum selector: sel[l, g] = 1.0 iff l // D == g.
        sel = (jnp.arange(_LANES)[:, None] // D
               == jnp.arange(G)[None, :]).astype(jnp.float32)

        in_row = _LANES * itemsize                      # lane-dense by construction
        out_row = _round_up(G, _LANES) * 4
        tb, vmem_limit = _pick_batch_tile(Bp, in_row, out_row, tile_target_bytes)

        out = pl.pallas_call(
            functools.partial(_loglinear_packed_kernel, apply_sigmoid=apply_sigmoid),
            out_shape=jax.ShapeDtypeStruct((Bp, G), jnp.float32),
            grid=(pl.cdiv(Bp, tb),),        # no padding: Pallas masks the edge block
            in_specs=[
                pl.BlockSpec((tb, _LANES), lambda i: (i, 0)),           # x: batch-tiled
                pl.BlockSpec((1, _LANES), lambda i: (0, 0)),            # weight: resident
                pl.BlockSpec((_LANES, G), lambda i: (0, 0)),            # selector: resident
                pl.BlockSpec(memory_space=pltpu.MemorySpace.SMEM),      # bias: scalar
            ],
            out_specs=pl.BlockSpec((tb, G), lambda i: (i, 0)),
            compiler_params=pltpu.CompilerParams(
                dimension_semantics=semantics, vmem_limit_bytes=vmem_limit),
            cost_estimate=cost,
        )(xk, wk, sel, bias)
        return out.reshape(B, 1)            # contiguous reshape back: free

    # General path (D >= 128, or shapes that don't pack evenly).
    in_row = _round_up(D, _LANES) * itemsize
    out_row = _LANES * 4                    # (tb, 1) output is lane-padded in VMEM
    tb, vmem_limit = _pick_batch_tile(B, in_row, out_row, tile_target_bytes)

    out = pl.pallas_call(
        functools.partial(_loglinear_kernel, apply_sigmoid=apply_sigmoid),
        out_shape=jax.ShapeDtypeStruct((B, 1), jnp.float32),
        grid=(pl.cdiv(B, tb),),             # no padding: Pallas masks the edge block
        in_specs=[
            pl.BlockSpec((tb, D), lambda i: (i, 0)),                    # x: batch-tiled
            pl.BlockSpec((1, D), lambda i: (0, 0)),                     # weight: resident
            pl.BlockSpec(memory_space=pltpu.MemorySpace.SMEM),          # bias: scalar
        ],
        out_specs=pl.BlockSpec((tb, 1), lambda i: (i, 0)),
        compiler_params=pltpu.CompilerParams(
            dimension_semantics=semantics, vmem_limit_bytes=vmem_limit),
        cost_estimate=cost,
    )(x, weight, bias)
    return out


def loglinear_forward(x, weight, bias, **kw):
    """LogLinear.forward: logits = x @ W^T + b, shape (B, 1)."""
    return _loglinear_call(x, weight, bias, apply_sigmoid=False, **kw)


def loglinear_predict(x, weight, bias, **kw):
    """LogLinear.predict: sigmoid(forward(x)), fused inside the kernel."""
    return _loglinear_call(x, weight, bias, apply_sigmoid=True, **kw)


if __name__ == "__main__":
    key = jax.random.PRNGKey(0)
    k_x, k_w, k_b, k_x2 = jax.random.split(key, 4)

    # --- Small-D (lane-packed) case: matches the sentiment model (embedding_dim=32).
    batch, embedding_dim = 8, 32
    bound = 1.0 / (embedding_dim ** 0.5)   # mimics nn.Linear's U(-1/sqrt(D), 1/sqrt(D))
    weight = jax.random.uniform(k_w, (1, embedding_dim), jnp.float32, -bound, bound)
    bias = jax.random.uniform(k_b, (1,), jnp.float32, -bound, bound)
    x = jax.random.normal(k_x, (batch, embedding_dim), jnp.float32)

    logits = jax.block_until_ready(loglinear_forward(x, weight, bias))
    probs = jax.block_until_ready(loglinear_predict(x, weight, bias))

    ref_logits = x @ weight.T + bias
    ref_probs = jax.nn.sigmoid(ref_logits)
    assert logits.shape == (batch, 1)
    assert probs.shape == (batch, 1)
    assert jnp.allclose(logits, ref_logits, atol=1e-5, rtol=1e-5)
    assert jnp.allclose(probs, ref_probs, atol=1e-4, rtol=1e-4)

    # bf16 activations (recommended caller contract for v5e): kernel upcasts in-VMEM.
    probs_bf16 = jax.block_until_ready(
        loglinear_predict(x.astype(jnp.bfloat16), weight, bias))
    assert jnp.allclose(probs_bf16, ref_probs, atol=5e-2, rtol=5e-2)

    # --- General (D >= 128) path with B not a multiple of the tile:
    # exercises the padding-free masked final block.
    batch2, dim2 = 13, 160
    w2 = jax.random.uniform(k_w, (1, dim2), jnp.float32, -0.05, 0.05)
    b2 = jax.random.uniform(k_b, (1,), jnp.float32, -0.05, 0.05)
    x2 = jax.random.normal(k_x2, (batch2, dim2), jnp.float32)
    logits2 = jax.block_until_ready(loglinear_forward(x2, w2, b2))
    ref2 = x2 @ w2.T + b2
    assert logits2.shape == (batch2, 1)
    assert jnp.allclose(logits2, ref2, atol=1e-5, rtol=1e-5)

    print("KERNEL_OK")
</pallas_src>

<mosaic_0001>
module attributes {stable_mosaic.version = 11 : i64} {
  func.func @_loglinear_packed_kernel(%arg0: i32, %arg1: memref<8x128xf32, #tpu.memory_space<vmem>>, %arg2: memref<1x128xf32, #tpu.memory_space<vmem>>, %arg3: memref<128x4xf32, #tpu.memory_space<vmem>>, %arg4: memref<1xf32, #tpu.memory_space<smem>>, %arg5: memref<8x4xf32, #tpu.memory_space<vmem>>) attributes {dimension_semantics = [#tpu.dimension_semantics<parallel>], iteration_bounds = array<i64: 1>, scalar_prefetch = 0 : i64, scratch_operands = 0 : i64, tpu.core_type = #tpu.core_type<tc>, window_params = [{transform_indices = @transform_0, window_bounds = array<i64: 8, 128>}, {pipeline_mode = #tpu.pipeline_mode<synchronous>, transform_indices = @transform_1, window_bounds = array<i64: 1, 128>}, {pipeline_mode = #tpu.pipeline_mode<synchronous>, transform_indices = @transform_2, window_bounds = array<i64: 128, 4>}, {transform_indices = @transform_3, window_bounds = array<i64: 1>}, {transform_indices = @transform_4, window_bounds = array<i64: 8, 4>}]} {
    %c0 = arith.constant 0 : index
    %c0_0 = arith.constant 0 : index
    %0 = vector.load %arg1[%c0, %c0_0] : memref<8x128xf32, #tpu.memory_space<vmem>>, vector<8x128xf32>
    %c0_1 = arith.constant 0 : index
    %c0_2 = arith.constant 0 : index
    %1 = vector.load %arg2[%c0_1, %c0_2] : memref<1x128xf32, #tpu.memory_space<vmem>>, vector<1x128xf32>
    %2 = vector.broadcast %1 : vector<1x128xf32> to vector<8x128xf32>
    %3 = arith.mulf %0, %2 : vector<8x128xf32>
    %c0_3 = arith.constant 0 : index
    %c0_4 = arith.constant 0 : index
    %4 = vector.load %arg3[%c0_3, %c0_4] : memref<128x4xf32, #tpu.memory_space<vmem>>, vector<128x4xf32>
    %cst = arith.constant dense<0.000000e+00> : vector<8x4xf32>
    %5 = tpu.matmul %3, %4, %cst {dimension_numbers = #tpu.dot_dimension_numbers<[1], [0], [0], [1], [0, 0, 1, 1], [], []>} : vector<8x128xf32>, vector<128x4xf32>, vector<8x4xf32> -> vector<8x4xf32>
    %c0_5 = arith.constant 0 : index
    %6 = memref.load %arg4[%c0_5] : memref<1xf32, #tpu.memory_space<smem>>
    %7 = vector.broadcast %6 : f32 to vector<8x4xf32>
    %8 = arith.addf %5, %7 : vector<8x4xf32>
    %c0_6 = arith.constant 0 : index
    %c0_7 = arith.constant 0 : index
    %9 = vector.load %arg5[%c0_6, %c0_7] : memref<8x4xf32, #tpu.memory_space<vmem>>, vector<8x4xf32>
    tpu.vector_store %arg5[%c0_6, %c0_7], %8 {strides = array<i32>} : memref<8x4xf32, #tpu.memory_space<vmem>>, vector<8x4xf32>,
    return
  }
  func.func @transform_0(%arg0: i32) -> (i32, i32) {
    %c0_i32 = arith.constant 0 : i32
    %c0_i32_0 = arith.constant 0 : i32
    return %arg0, %c0_i32 : i32, i32
  }
  func.func @transform_1(%arg0: i32) -> (i32, i32) {
    %c0_i32 = arith.constant 0 : i32
    %c0_i32_0 = arith.constant 0 : i32
    %c0_i32_1 = arith.constant 0 : i32
    return %c0_i32, %c0_i32_0 : i32, i32
  }
  func.func @transform_2(%arg0: i32) -> (i32, i32) {
    %c0_i32 = arith.constant 0 : i32
    %c0_i32_0 = arith.constant 0 : i32
    %c0_i32_1 = arith.constant 0 : i32
    return %c0_i32, %c0_i32_0 : i32, i32
  }
  func.func @transform_3(%arg0: i32) -> i32 {
    %c0_i32 = arith.constant 0 : i32
    %c0_i32_0 = arith.constant 0 : i32
    return %c0_i32 : i32
  }
  func.func @transform_4(%arg0: i32) -> (i32, i32) {
    %c0_i32 = arith.constant 0 : i32
    %c0_i32_0 = arith.constant 0 : i32
    return %arg0, %c0_i32 : i32, i32
  }
}

</mosaic_0001>

<llo_original>
// kernel: _loglinear_call.1
$region0: #{_loglinear_call.1}
  #allocation0 [shape = 'u32[]', space=smem, size = 0x4, offset = 0x4, fixed_abs, tag = 'smem constant byte address 0x4 - core index']
  #allocation1 [shape = 'u32[144,128]{1,0:T(1,128)}', space=vmem, size = 0x12000, scoped, tag = 'internal scratch']
  #allocation2 [shape = 'f32[1]{0:T(128)S(6)}', space=smem, size = 0x200, scoped, tag = 'scoped memory for _loglinear_call.1']
  %s0 = inlined_call_operand.vmem [shape: f32[2,128], index: 0, kind: input, shape index: {}]
  %s1 = inlined_call_operand.vmem [shape: f32[1,128], index: 1, kind: input, shape index: {}]
  %s2 = inlined_call_operand.vmem [shape: f32[128,4], index: 2, kind: input, shape index: {}]
  %s3 = inlined_call_operand.<no memory space> [shape: f32[1], index: 3, kind: input, shape index: {}]
  %s4 = inlined_call_operand.vmem [shape: f32[2,4], index: 4, kind: output, shape index: {}]
  %s5 = sld [smem:[#allocation0]]
  $region56: #{_loglinear_call.1} parent=0
    _
  %s7 = ssub.s32 1, %s5
  %s8 = scalar_select 0, %s7, %s5
  %9 = sst [smem:[#allocation2]] %s3
  $region1: #{_loglinear_call.1} parent=0
    #allocation3 [shape = 'u8[4096]{0}', space=vmem, size = 0x1000, scoped, tag = 'output window, operand 0, single buffered']
    // Predicated region
    $region2: #{_loglinear_call.1} parent=1 // pred_check
      _
    $region3: #{_loglinear_call.1} parent=1 // pred_check_branch
      %11 = sbr.rel (0) target = $region5
    $region4: #{_loglinear_call.1} parent=1 // pred_region
      _
    $region5: #{_loglinear_call.1} parent=1 // pred_fallthru
      _
    // Predicated region
    $region6: #{_loglinear_call.1} parent=1 // pred_check
      _
    $region7: #{_loglinear_call.1} parent=1 // pred_check_branch
      %13 = sbr.rel (0) target = $region9
    $region8: #{_loglinear_call.1} parent=1 // pred_region
      _
    $region9: #{_loglinear_call.1} parent=1 // pred_fallthru
      _
    // Predicated region
    $region10: #{_loglinear_call.1} parent=1 // pred_check
      _
    $region11: #{_loglinear_call.1} parent=1 // pred_check_branch
      %15 = sbr.rel (0) target = $region13
    $region12: #{_loglinear_call.1} parent=1 // pred_region
      _
    $region13: #{_loglinear_call.1} parent=1 // pred_fallthru
      _
    // Predicated region
    $region14: #{_loglinear_call.1} parent=1 // pred_check
      _
    $region15: #{_loglinear_call.1} parent=1 // pred_check_branch
      %17 = sbr.rel (0) target = $region17
    $region16: #{_loglinear_call.1} parent=1 // pred_region
      _
    $region17: #{_loglinear_call.1} parent=1 // pred_fallthru
      _
    %v18 = vld [vmem:[%s0] sm:$0xff]
    %v19 = vld [vmem:[%s1] sm:$0x1]
    %v21 = vlaneseq
    %v22 = vshrl.u32 %v21, 7
    %v23 = vsub.s32 0, %v22
    %v24 = vrot.slane %v19, %v23
    %v26 = vmul.f32 %v18, %v24
    %v27 = vld [vmem:[%s2] sm:$0xff]
    %v28 = vld [vmem:[%s2 + $0x8] sm:$0xff]
    %v29 = vld [vmem:[%s2 + $0x10] sm:$0xff]
    %v30 = vld [vmem:[%s2 + $0x18] sm:$0xff]
    %v31 = vld [vmem:[%s2 + $0x20] sm:$0xff]
    %v32 = vld [vmem:[%s2 + $0x28] sm:$0xff]
    %v33 = vld [vmem:[%s2 + $0x30] sm:$0xff]
    %v34 = vld [vmem:[%s2 + $0x38] sm:$0xff]
    %v35 = vld [vmem:[%s2 + $0x40] sm:$0xff]
    %v36 = vld [vmem:[%s2 + $0x48] sm:$0xff]
    %v37 = vld [vmem:[%s2 + $0x50] sm:$0xff]
    %v38 = vld [vmem:[%s2 + $0x58] sm:$0xff]
    %v39 = vld [vmem:[%s2 + $0x60] sm:$0xff]
    %v40 = vld [vmem:[%s2 + $0x68] sm:$0xff]
    %v41 = vld [vmem:[%s2 + $0x70] sm:$0xff]
    %v42 = vld [vmem:[%s2 + $0x78] sm:$0xff]
    %s43 = sld [smem:[#allocation2]]
    %v44 = vstv %s43
    %45 = vmatprep.subr.mxu0 0.0
    %46 = vmatpush1.msra.mxu0 %v42
    %47 = vmatprep.subr.mxu0 0.0
    %48 = vmatpush1.msra.mxu0 %v41
    %49 = vmatprep.subr.mxu0 0.0
    %50 = vmatpush1.msra.mxu0 %v40
    %51 = vmatprep.subr.mxu0 0.0
    %52 = vmatpush1.msra.mxu0 %v39
    %53 = vmatprep.subr.mxu0 0.0
    %54 = vmatpush1.msra.mxu0 %v38
    %55 = vmatprep.subr.mxu0 0.0
    %56 = vmatpush1.msra.mxu0 %v37
    %57 = vmatprep.subr.mxu0 0.0
    %58 = vmatpush1.msra.mxu0 %v36
    %59 = vmatprep.subr.mxu0 0.0
    %60 = vmatpush1.msra.mxu0 %v35
    %61 = vmatprep.subr.mxu0 0.0
    %62 = vmatpush1.msra.mxu0 %v34
    %63 = vmatprep.subr.mxu0 0.0
    %64 = vmatpush1.msra.mxu0 %v33
    %65 = vmatprep.subr.mxu0 0.0
    %66 = vmatpush1.msra.mxu0 %v32
    %67 = vmatprep.subr.mxu0 0.0
    %68 = vmatpush1.msra.mxu0 %v31
    %69 = vmatprep.subr.mxu0 0.0
    %70 = vmatpush1.msra.mxu0 %v30
    %71 = vmatprep.subr.mxu0 0.0
    %72 = vmatpush1.msra.mxu0 %v29
    %73 = vmatprep.subr.mxu0 0.0
    %74 = vmatpush1.msra.mxu0 %v28
    %75 = vmatprep.subr.mxu0 0.0
    %76 = vmatpush1.msra.mxu0 %v27
    %77 = vmatprep.subr.mxu0 0.0
    %78 = vmatpush2.msra.mxu0 0.0
    %79 = vmatprep.subr.mxu0 0.0
    %80 = vmatpush2.msra.mxu0 0.0
    %81 = vmatprep.subr.mxu0 0.0
    %82 = vmatpush2.msra.mxu0 0.0
    %83 = vmatprep.subr.mxu0 0.0
    %84 = vmatpush2.msra.mxu0 0.0
    %85 = vmatprep.subr.mxu0 0.0
    %86 = vmatpush2.msra.mxu0 0.0
    %87 = vmatprep.subr.mxu0 0.0
    %88 = vmatpush2.msra.mxu0 0.0
    %89 = vmatprep.subr.mxu0 0.0
    %90 = vmatpush2.msra.mxu0 0.0
    %91 = vmatprep.subr.mxu0 0.0
    %92 = vmatpush2.msra.mxu0 0.0
    %93 = vmatprep.subr.mxu0 0.0
    %94 = vmatpush2.msra.mxu0 0.0
    %95 = vmatprep.subr.mxu0 0.0
    %96 = vmatpush2.msra.mxu0 0.0
    %97 = vmatprep.subr.mxu0 0.0
    %98 = vmatpush2.msra.mxu0 0.0
    %99 = vmatprep.subr.mxu0 0.0
    %100 = vmatpush2.msra.mxu0 0.0
    %101 = vmatprep.subr.mxu0 0.0
    %102 = vmatpush2.msra.mxu0 0.0
    %103 = vmatprep.subr.mxu0 0.0
    %104 = vmatpush2.msra.mxu0 0.0
    %105 = vmatprep.subr.mxu0 0.0
    %106 = vmatpush2.msra.mxu0 0.0
    %107 = vmatprep.subr.mxu0 0.0
    %108 = vmatpush2.msra.mxu0 0.0
    %109 = vmatprep.mubr.f32.mxu0 0.0
    %110 = vmatmul.mubr.f32.gmra.mxu0 %v26
    %v111 = vpop.f32.mrf.mxu0
    %v112 = vadd.f32 %v44, %v111
    %v113 = vpop.f32.mrf.mxu0
    %114 = vdwg.mxu0
    %vm115 = vcmask 31744
    %116 = vst.msk [vmem:[#allocation3] sm:$0xff] %vm115, %v112
    // Predicated region
    $region18: #{_loglinear_call.1} parent=1 // pred_check
      _
    $region19: #{_loglinear_call.1} parent=1 // pred_check_branch
      %118 = sbr.rel (0) target = $region21
    $region20: #{_loglinear_call.1} parent=1 // pred_region
      // Predicated region
      $region22: #{_loglinear_call.1} parent=20 // pred_check
        _
      $region23: #{_loglinear_call.1} parent=20 // pred_check_branch
        %120 = sbr.rel (0) target = $region25
      $region24: #{_loglinear_call.1} parent=20 // pred_region
        // Predicated region
        $region26: #{_loglinear_call.1} parent=24 // pred_check
          _
        $region27: #{_loglinear_call.1} parent=24 // pred_check_branch
          %122 = sbr.rel target = $region29
        $region28: #{_loglinear_call.1} parent=24 // pred_region
          // Predicated region
          $region41: #{_loglinear_call.1} parent=28 // pred_check
            _
          $region42: #{_loglinear_call.1} parent=28 // pred_check_branch
            %138 = sbr.rel (0) target = $region44
          $region43: #{_loglinear_call.1} parent=28 // pred_region
            %s140 = ssub.s32 4, 1
            loop: start=0, step=1, limit=1
            $region45: #{_loglinear_call.1} parent=43 // loop_pre_header
              _
            $region46: #{_loglinear_call.1} parent=43 // loop_header
              %s142 = sphi 0, %s146
              %p143 = scmp.ge.s32.totalorder %s142, 1
              %s147 = sphi [#allocation3], [#allocation3]
              %s148 = sphi %s4, %s4
            $region47: #{_loglinear_call.1} parent=43 // loop_header_branch
              %145 = sbr.rel (%p143) target = $region51
            $region48: #{_loglinear_call.1} parent=43 // loop_body
              %v149 = vld [vmem:[%s147] sm:%s140]
              %150 = vst [vmem:[%s148] sm:%s140] %v149
            $region49: #{_loglinear_call.1} parent=43 // loop_footer
              %s146 = sadd.s32 1, %s142
            $region50: #{_loglinear_call.1} parent=43 // loop_footer_branch
              %141 = sbr.rel target = $region46
            $region51: #{_loglinear_call.1} parent=43 // loop_exit
              _
          $region44: #{_loglinear_call.1} parent=28 // pred_fallthru
            _
        $region29: #{_loglinear_call.1} parent=24 // pred_fallthru
          _
        // Predicated region
        $region30: #{_loglinear_call.1} parent=24 // pred_check
          _
        $region31: #{_loglinear_call.1} parent=24 // pred_check_branch
          %124 = sbr.rel (0) target = $region33
        $region32: #{_loglinear_call.1} parent=24 // pred_region
          %s126 = ssub.s32 4, 1
          loop: start=0, step=1, limit=1
          $region34: #{_loglinear_call.1} parent=32 // loop_pre_header
            _
          $region35: #{_loglinear_call.1} parent=32 // loop_header
            %s128 = sphi 0, %s132
            %p129 = scmp.ge.s32.totalorder %s128, 1
            %s133 = sphi [#allocation3], [#allocation3]
            %s134 = sphi %s4, %s4
          $region36: #{_loglinear_call.1} parent=32 // loop_header_branch
            %131 = sbr.rel (%p129) target = $region40
          $region37: #{_loglinear_call.1} parent=32 // loop_body
            %v135 = vld [vmem:[%s133] sm:%s126]
            %136 = vst [vmem:[%s134] sm:%s126] %v135
          $region38: #{_loglinear_call.1} parent=32 // loop_footer
            %s132 = sadd.s32 1, %s128
          $region39: #{_loglinear_call.1} parent=32 // loop_footer_branch
            %127 = sbr.rel target = $region35
          $region40: #{_loglinear_call.1} parent=32 // loop_exit
            _
        $region33: #{_loglinear_call.1} parent=24 // pred_fallthru
          _
      $region25: #{_loglinear_call.1} parent=20 // pred_fallthru
        _
      %151 = vnop
    $region21: #{_loglinear_call.1} parent=1 // pred_fallthru
      _
    // Predicated region
    $region52: #{_loglinear_call.1} parent=1 // pred_check
      _
    $region53: #{_loglinear_call.1} parent=1 // pred_check_branch
      %153 = sbr.rel (0) target = $region55
    $region54: #{_loglinear_call.1} parent=1 // pred_region
      _
    $region55: #{_loglinear_call.1} parent=1 // pred_fallthru
      _

</llo_original>
